<compile_context>
chip_gen: v6e
topology: v6e:2x2x1
jax: 0.10.0
libtpu: 0.0.40
codegen_flags: <defaults>
</compile_context>

<pallas_src>
import functools

import jax
import jax.numpy as jnp
from jax import lax
from jax.experimental import pallas as pl
from jax.experimental.pallas import tpu as pltpu


def _wce_kernel(pred_ref, tgt_ref, w_ref, out_ref, acc_ref,
                *, num_classes: int, chunk: int, n_chunks: int):
    t = pl.program_id(2)          # pixel-tile index within this (batch, split)

    @pl.when(t == 0)
    def _():
        acc_ref[...] = jnp.zeros_like(acc_ref)

    # (C, 1) class iota — broadcast happens inside the compare, no (C, T) iota
    # is ever materialized.
    class_ids = lax.broadcasted_iota(jnp.int32, (num_classes, 1), 0)

    # Fully-unrolled sub-chunk loop with a vreg-resident accumulator.  Static
    # slice offsets -> zero-cost ref views, full LLO scheduler visibility.
    acc = acc_ref[...]                                  # (1, chunk) f32
    for j in range(n_chunks):
        sl = pl.ds(j * chunk, chunk)
        logits = pred_ref[:, sl]                        # (C, chunk) f32
        tgt = tgt_ref[:, sl]                            # (1, chunk) i32
        w = w_ref[:, sl]                                # (1, chunk) f32 in {0,.5,1}

        m = jnp.max(logits, axis=0, keepdims=True)      # (1, chunk)
        z = logits - m
        sumexp = jnp.sum(jnp.exp(z), axis=0, keepdims=True)
        z_tgt = jnp.sum(jnp.where(class_ids == tgt, z, 0.0),
                        axis=0, keepdims=True)          # = logit_tgt - m
        ce = jnp.log(sumexp) - z_tgt                    # = logsumexp - logit_tgt
        # w == 0 for ignore_index pixels and for the zero-padded ragged edge; the
        # select (not the multiply) keeps inf/NaN garbage out of the sum.
        acc = acc + jnp.where(w > 0.0, w * ce, 0.0)
    acc_ref[...] = acc

    @pl.when(t == pl.num_programs(2) - 1)
    def _():
        # One lane-dense, unmasked (8, 128) store per (batch, split).
        out_ref[...] = jnp.broadcast_to(
            jnp.sum(acc, axis=1, keepdims=True), out_ref.shape)


def custom_cross_entropy_loss(pred, target, ME, *, num_classes: int,
                              ignore_index: int = 4, tile_hw: int = 16384,
                              vmem_budget_bytes: int = 20 * 1024 * 1024):
    """pred: (N, C, H, W) f32 logits; target: (N, H, W) int; ME: (N, H, W)."""
    N, C, H, W = pred.shape
    assert C == num_classes
    HW = H * W

    # Free, contiguous reshapes — no transpose, no padding of pred / target.
    pred3 = pred.reshape(N, C, HW).astype(jnp.float32)
    tgt3 = target.reshape(N, 1, HW).astype(jnp.int32)

    # Fused per-pixel weight (review: fold ME select + ignore mask into the cast
    # the wrapper already performs).  w == 0 exactly on ignored pixels.
    w3 = jnp.where(target == ignore_index, 0.0,
                   jnp.where(ME == 0, 1.0, 0.5)).astype(jnp.float32)
    w3 = w3.reshape(N, 1, HW)

    # mask.sum() — tiny elementwise+reduce over the small target tensor; XLA fuses
    # it with the weight computation above, removing the second kernel accumulator.
    cnt = jnp.sum((target != ignore_index).astype(jnp.float32))

    # ---- tile-size selection: VMEM-budget aware, prefer whole-image tiles ------
    cpad = ((C + 7) // 8) * 8
    # double-buffered f32 bytes per pixel lane: pred (cpad rows) + tgt + w (8 rows
    # each once padded to the (8, 128) tiling)
    per_lane = 8 * (cpad + 16)
    budget_tile = max(512, (vmem_budget_bytes // per_lane) // 512 * 512)
    tile = min(((tile_hw + 511) // 512) * 512, budget_tile)
    hw128 = ((HW + 127) // 128) * 128
    if hw128 <= tile:
        tile = hw128                      # whole image per batch element, 1 step
    num_tiles = (HW + tile - 1) // tile
    chunk = next(c for c in (512, 256, 128) if tile % c == 0)

    # Split the pixel-tile range across a second parallel grid axis so v7x's two
    # TensorCores get work even when N == 1 (neutral on single-TC chips).
    S = 2 if (num_tiles >= 2 and num_tiles % 2 == 0) else 1
    tps = num_tiles // S

    # Only the small weight plane is padded (zeros -> padded pixels contribute 0).
    hwp = num_tiles * tile
    if hwp != HW:
        w3 = jnp.pad(w3, ((0, 0), (0, 0), (0, hwp - HW)))

    kernel = functools.partial(_wce_kernel, num_classes=C,
                               chunk=chunk, n_chunks=tile // chunk)

    out = pl.pallas_call(
        kernel,
        out_shape=jax.ShapeDtypeStruct((N * S * 8, 128), jnp.float32),
        grid_spec=pltpu.PrefetchScalarGridSpec(
            num_scalar_prefetch=0,
            grid=(N, S, tps),
            in_specs=[
                pl.BlockSpec((pl.Squeezed(), C, tile),
                             lambda n, s, t: (n, 0, s * tps + t)),
                pl.BlockSpec((pl.Squeezed(), 1, tile),
                             lambda n, s, t: (n, 0, s * tps + t)),
                pl.BlockSpec((pl.Squeezed(), 1, tile),
                             lambda n, s, t: (n, 0, s * tps + t)),
            ],
            out_specs=pl.BlockSpec((8, 128), lambda n, s, t: (n * S + s, 0)),
            scratch_shapes=[
                pltpu.VMEM((1, chunk), jnp.float32),   # per-(n,s) loss carry
            ],
        ),
        compiler_params=pltpu.CompilerParams(
            dimension_semantics=("parallel", "parallel", "arbitrary"),
            vmem_limit_bytes=32 * 1024 * 1024),
    )(pred3, tgt3, w3)

    # Final tiny reduction + scalar division (== weighted_loss.sum() / mask.sum()).
    loss_sum = jnp.sum(out.reshape(N * S, 8, 128)[:, 0, 0])
    return (loss_sum / cnt).astype(jnp.float32)


if __name__ == "__main__":
    key = jax.random.PRNGKey(0)
    k1, k2, k3 = jax.random.split(key, 3)

    N, C, H, W = 2, 5, 16, 16            # num_classes=5, ignore_index=4
    pred = jax.random.normal(k1, (N, C, H, W), dtype=jnp.float32)
    target = jax.random.randint(k2, (N, H, W), 0, C, dtype=jnp.int32)  # includes ignore=4
    ME = jax.random.randint(k3, (N, H, W), 0, 3, dtype=jnp.int32).astype(jnp.float32)

    out = custom_cross_entropy_loss(pred, target, ME, num_classes=C, ignore_index=4)
    out = jax.block_until_ready(out)

    # Pure-JAX reference check (same math as the PyTorch module).
    logp = jax.nn.log_softmax(pred, axis=1)
    tgt_c = jnp.clip(target, 0, C - 1)
    nll = -jnp.take_along_axis(logp, tgt_c[:, None], axis=1)[:, 0]
    mask = (target != 4).astype(jnp.float32)
    loss = nll * mask
    mec = (ME == 0.0).astype(jnp.float32)
    ref = jnp.sum((0.5 + 0.5 * mec) * loss) / jnp.sum(mask)
    assert jnp.allclose(out, ref, rtol=1e-5, atol=1e-5), (out, ref)

    print("KERNEL_OK")
</pallas_src>

<mosaic_0001>
module attributes {stable_mosaic.version = 11 : i64} {
  func.func @_wce_kernel(%arg0: i32, %arg1: i32, %arg2: i32, %arg3: memref<1x5x256xf32, #tpu.memory_space<vmem>>, %arg4: memref<1x1x256xi32, #tpu.memory_space<vmem>>, %arg5: memref<1x1x256xf32, #tpu.memory_space<vmem>>, %arg6: memref<8x128xf32, #tpu.memory_space<vmem>>, %arg7: memref<1x256xf32, #tpu.memory_space<vmem>>) attributes {dimension_semantics = [#tpu.dimension_semantics<parallel>, #tpu.dimension_semantics<parallel>, #tpu.dimension_semantics<arbitrary>], iteration_bounds = array<i64: 2, 1, 1>, scalar_prefetch = 0 : i64, scratch_operands = 1 : i64, tpu.core_type = #tpu.core_type<tc>, window_params = [{transform_indices = @transform_0, window_bounds = array<i64: 1, 5, 256>}, {transform_indices = @transform_1, window_bounds = array<i64: 1, 1, 256>}, {transform_indices = @transform_2, window_bounds = array<i64: 1, 1, 256>}, {transform_indices = @transform_3, window_bounds = array<i64: 8, 128>}]} {
    %c0_i32 = arith.constant 0 : i32
    %0 = arith.cmpi eq, %arg2, %c0_i32 : i32
    %1 = arith.extui %0 : i1 to i32
    %c0_i32_0 = arith.constant 0 : i32
    %2 = arith.cmpi ne, %1, %c0_i32_0 : i32
    scf.if %2 {
      %cst_20 = arith.constant 0.000000e+00 : f32
      %37 = vector.broadcast %cst_20 : f32 to vector<1x256xf32>
      %c0_21 = arith.constant 0 : index
      %c0_22 = arith.constant 0 : index
      %38 = vector.load %arg7[%c0_21, %c0_22] : memref<1x256xf32, #tpu.memory_space<vmem>>, vector<1x256xf32>
      tpu.vector_store %arg7[%c0_21, %c0_22], %37 {strides = array<i32>} : memref<1x256xf32, #tpu.memory_space<vmem>>, vector<1x256xf32>,
    } else {
    }
    %3 = tpu.iota {dimensions = array<i32: 0>} : vector<5x1xi32>
    %c0 = arith.constant 0 : index
    %c0_1 = arith.constant 0 : index
    %4 = vector.load %arg7[%c0, %c0_1] : memref<1x256xf32, #tpu.memory_space<vmem>>, vector<1x256xf32>
    %c0_2 = arith.constant 0 : index
    %c0_3 = arith.constant 0 : index
    %c0_4 = arith.constant 0 : index
    %5 = vector.load %arg3[%c0_2, %c0_3, %c0_4] : memref<1x5x256xf32, #tpu.memory_space<vmem>>, vector<1x5x256xf32>
    %6 = vector.shape_cast %5 : vector<1x5x256xf32> to vector<5x256xf32>
    %c0_5 = arith.constant 0 : index
    %c0_6 = arith.constant 0 : index
    %c0_7 = arith.constant 0 : index
    %7 = vector.load %arg4[%c0_5, %c0_6, %c0_7] : memref<1x1x256xi32, #tpu.memory_space<vmem>>, vector<1x1x256xi32>
    %8 = vector.shape_cast %7 : vector<1x1x256xi32> to vector<1x256xi32>
    %c0_8 = arith.constant 0 : index
    %c0_9 = arith.constant 0 : index
    %c0_10 = arith.constant 0 : index
    %9 = vector.load %arg5[%c0_8, %c0_9, %c0_10] : memref<1x1x256xf32, #tpu.memory_space<vmem>>, vector<1x1x256xf32>
    %10 = vector.shape_cast %9 : vector<1x1x256xf32> to vector<1x256xf32>
    %cst = arith.constant dense<0xFF800000> : vector<256xf32>
    %11 = vector.multi_reduction <maximumf>, %6, %cst [0] : vector<5x256xf32> to vector<256xf32>
    %12 = vector.shape_cast %11 : vector<256xf32> to vector<1x256xf32>
    %13 = vector.broadcast %12 : vector<1x256xf32> to vector<5x256xf32>
    %14 = arith.subf %6, %13 : vector<5x256xf32>
    %15 = math.exp %14 : vector<5x256xf32>
    %cst_11 = arith.constant dense<0.000000e+00> : vector<256xf32>
    %16 = vector.multi_reduction <add>, %15, %cst_11 [0] : vector<5x256xf32> to vector<256xf32>
    %17 = vector.shape_cast %16 : vector<256xf32> to vector<1x256xf32>
    %18 = vector.broadcast %3 : vector<5x1xi32> to vector<5x256xi32>
    %19 = vector.broadcast %8 : vector<1x256xi32> to vector<5x256xi32>
    %20 = arith.cmpi eq, %18, %19 : vector<5x256xi32>
    %cst_12 = arith.constant 0.000000e+00 : f32
    %21 = vector.broadcast %cst_12 : f32 to vector<5x256xf32>
    %22 = arith.select %20, %14, %21 : vector<5x256xi1>, vector<5x256xf32>
    %cst_13 = arith.constant dense<0.000000e+00> : vector<256xf32>
    %23 = vector.multi_reduction <add>, %22, %cst_13 [0] : vector<5x256xf32> to vector<256xf32>
    %24 = vector.shape_cast %23 : vector<256xf32> to vector<1x256xf32>
    %25 = math.log %17 : vector<1x256xf32>
    %26 = arith.subf %25, %24 : vector<1x256xf32>
    %cst_14 = arith.constant 0.000000e+00 : f32
    %27 = vector.broadcast %cst_14 : f32 to vector<1x256xf32>
    %28 = arith.cmpf ogt, %10, %27 : vector<1x256xf32>
    %29 = arith.mulf %10, %26 : vector<1x256xf32>
    %cst_15 = arith.constant 0.000000e+00 : f32
    %30 = vector.broadcast %cst_15 : f32 to vector<1x256xf32>
    %31 = arith.select %28, %29, %30 : vector<1x256xi1>, vector<1x256xf32>
    %32 = arith.addf %4, %31 : vector<1x256xf32>
    %c0_16 = arith.constant 0 : index
    %c0_17 = arith.constant 0 : index
    %33 = vector.load %arg7[%c0_16, %c0_17] : memref<1x256xf32, #tpu.memory_space<vmem>>, vector<1x256xf32>
    tpu.vector_store %arg7[%c0_16, %c0_17], %32 {strides = array<i32>} : memref<1x256xf32, #tpu.memory_space<vmem>>, vector<1x256xf32>,
    %c0_i32_18 = arith.constant 0 : i32
    %34 = arith.cmpi eq, %arg2, %c0_i32_18 : i32
    %35 = arith.extui %34 : i1 to i32
    %c0_i32_19 = arith.constant 0 : i32
    %36 = arith.cmpi ne, %35, %c0_i32_19 : i32
    scf.if %36 {
      %cst_20 = arith.constant dense<0.000000e+00> : vector<1xf32>
      %37 = vector.multi_reduction <add>, %32, %cst_20 [1] : vector<1x256xf32> to vector<1xf32>
      %38 = vector.shape_cast %37 : vector<1xf32> to vector<1x1xf32>
      %39 = vector.shape_cast %38 : vector<1x1xf32> to vector<1x1xf32>
      %40 = vector.broadcast %39 : vector<1x1xf32> to vector<8x128xf32>
      %c0_21 = arith.constant 0 : index
      %c0_22 = arith.constant 0 : index
      %41 = vector.load %arg6[%c0_21, %c0_22] : memref<8x128xf32, #tpu.memory_space<vmem>>, vector<8x128xf32>
      tpu.vector_store %arg6[%c0_21, %c0_22], %40 {strides = array<i32>} : memref<8x128xf32, #tpu.memory_space<vmem>>, vector<8x128xf32>,
    } else {
    }
    return
  }
  func.func @transform_0(%arg0: i32, %arg1: i32, %arg2: i32) -> (i32, i32, i32) {
    %c1_i32 = arith.constant 1 : i32
    %0 = arith.muli %arg1, %c1_i32 : i32
    %1 = arith.addi %0, %arg2 : i32
    %c0_i32 = arith.constant 0 : i32
    %c0_i32_0 = arith.constant 0 : i32
    return %arg0, %c0_i32, %1 : i32, i32, i32
  }
  func.func @transform_1(%arg0: i32, %arg1: i32, %arg2: i32) -> (i32, i32, i32) {
    %c1_i32 = arith.constant 1 : i32
    %0 = arith.muli %arg1, %c1_i32 : i32
    %1 = arith.addi %0, %arg2 : i32
    %c0_i32 = arith.constant 0 : i32
    %c0_i32_0 = arith.constant 0 : i32
    return %arg0, %c0_i32, %1 : i32, i32, i32
  }
  func.func @transform_2(%arg0: i32, %arg1: i32, %arg2: i32) -> (i32, i32, i32) {
    %c1_i32 = arith.constant 1 : i32
    %0 = arith.muli %arg1, %c1_i32 : i32
    %1 = arith.addi %0, %arg2 : i32
    %c0_i32 = arith.constant 0 : i32
    %c0_i32_0 = arith.constant 0 : i32
    return %arg0, %c0_i32, %1 : i32, i32, i32
  }
  func.func @transform_3(%arg0: i32, %arg1: i32, %arg2: i32) -> (i32, i32) {
    %c1_i32 = arith.constant 1 : i32
    %0 = arith.muli %arg0, %c1_i32 : i32
    %1 = arith.addi %0, %arg1 : i32
    %c0_i32 = arith.constant 0 : i32
    %c0_i32_0 = arith.constant 0 : i32
    return %1, %c0_i32 : i32, i32
  }
}

</mosaic_0001>

<llo_original>
// kernel: tpu_custom_call.1
$region0: #{tpu_custom_call.1}
  #allocation0 [shape = 'u32[]', space=smem, size = 0x4, offset = 0x4, fixed_abs, tag = 'smem constant byte address 0x4 - core index']
  #allocation1 [shape = 'u32[144,128]{1,0:T(1,128)}', space=vmem, size = 0x12000, scoped, tag = 'internal scratch']
  #allocation2 [shape = 'f32[1,256]{1,0:T(1,128)}', space=vmem, size = 0x400, scoped, tag = 'scratch operand']
  %s0 = inlined_call_operand.vmem [shape: f32[2,5,256], index: 0, kind: input, shape index: {}]
  %s1 = inlined_call_operand.vmem [shape: s32[2,1,256], index: 1, kind: input, shape index: {}]
  %s2 = inlined_call_operand.vmem [shape: f32[2,1,256], index: 2, kind: input, shape index: {}]
  %s3 = inlined_call_operand.hbm [shape: f32[16,128], index: 3, kind: output, shape index: {}]
  %s4 = sld [smem:[#allocation0]]
  $region53: #{tpu_custom_call.1} parent=0
    _
  %s6 = ssub.s32 1, %s4
  %s7 = scalar_select 0, %s6, %s4
  $region1: #{tpu_custom_call.1} parent=0
    #allocation3 [shape = 'u8[8192]{0}', space=vmem, size = 0x2000, scoped, tag = 'output window, operand 0']
    #allocation4 [shape = 's32[2]{0}', space=sflag, size = 0x8, scoped, tag = 'scoped memory for tpu_custom_call.1']
    %8 = vsyncpa [#allocation4], 0
    %s9 = scalar_lea.sflag [#allocation4], 1
    %10 = vsyncpa %s9, 0
    loop: start=0, step=1, limit=4
    $region2: #{tpu_custom_call.1} parent=1 // loop_pre_header
      _
    $region3: #{tpu_custom_call.1} parent=1 // loop_header
      %s12 = sphi 0, %s16
      %p13 = scmp.ge.s32.totalorder %s12, 4
      %s19 = sphi 0, %s38
      %s20 = sphi 0, %s34
      %s21 = sphi 0, %s30
      %s22 = sphi 0, %s19
      %s23 = sphi 0, %s20
      %s24 = sphi 0, %s21
      %s25 = sphi 0, %s22
      %s26 = sphi 0, %s23
      %s27 = sphi 0, %s24
      %s45 = sphi 0, %s47
      %s48 = sphi 0, %s45
      %s49 = sphi 0, %s48
      %s65 = sphi 0, %s49
      %s75 = sphi 0, %s77
      %s78 = sphi 0, %s75
      %s79 = sphi 0, %s78
      %s95 = sphi 0, %s79
      %s105 = sphi 0, %s107
      %s108 = sphi 0, %s105
      %s109 = sphi 0, %s108
      %s125 = sphi 0, %s109
      %s133 = sphi 0, %s135
      %s136 = sphi 0, %s133
      %s137 = sphi 0, %s136
      %s153 = sphi 0, %s137
    $region4: #{tpu_custom_call.1} parent=1 // loop_header_branch
      %15 = sbr.rel (%p13) target = $region8
    $region5: #{tpu_custom_call.1} parent=1 // loop_body
      %s17 = ssub.s32 %s12, 1
      %s18 = ssub.s32 %s12, 2
      %s28 = sadd.s32 1, %s21
      %p29 = scmp.ge.s32.totalorder %s28, 1
      %s30 = scalar_select %p29, 0, %s28
      %s31 = sadd.s32 1, %s20
      %s32 = scalar_select %p29, %s31, %s20
      %p33 = scmp.ge.s32.totalorder %s32, 1
      %s34 = scalar_select %p33, 0, %s32
      %s35 = sadd.s32 1, %s19
      %s36 = scalar_select %p33, %s35, %s19
      %p37 = scmp.ge.s32.totalorder %s36, 2
      %s38 = scalar_select %p37, 0, %s36
      %s39 = sadd.s32 %s20, %s21
      %s40 = sadd.s32 %s34, %s30
      %s41 = ssub.s32 %s19, %s38
      %s42 = ssub.s32 %s39, %s40
      %s43 = sor.u32 %s41, %s42
      %p44 = scmp.eq.s32.totalorder %s43, 0
      %s46 = sadd.s32 %s45, 1
      %s47 = scalar_select %p44, %s45, %s46
      %p50 = pneg %p44
      %p51 = scmp.eq.s32.totalorder %s12, 1
      %p52 = por %p50, %p51
      %p53 = scmp.ne.s32.totalorder %s45, %s48
      %p54 = scmp.eq.s32.totalorder %s12, 0
      %p55 = por %p53, %p54
      %p56 = scmp.ne.s32.totalorder %s45, %s48
      %p57 = scmp.eq.s32.totalorder %s17, 1
      %p58 = por %p56, %p57
      %p59 = scmp.ne.s32.totalorder %s48, %s49
      %p60 = scmp.eq.s32.totalorder %s17, 0
      %p61 = por %p59, %p60
      %p62 = scmp.ne.s32.totalorder %s48, %s49
      %p63 = scmp.eq.s32.totalorder %s18, 1
      %p64 = por %p62, %p63
      %p66 = scmp.ne.s32.totalorder %s49, %s65
      %p67 = scmp.eq.s32.totalorder %s18, 0
      %p68 = por %p66, %p67
      %s69 = sadd.s32 %s20, %s21
      %s70 = sadd.s32 %s34, %s30
      %s71 = ssub.s32 %s19, %s38
      %s72 = ssub.s32 %s69, %s70
      %s73 = sor.u32 %s71, %s72
      %p74 = scmp.eq.s32.totalorder %s73, 0
      %s76 = sadd.s32 %s75, 1
      %s77 = scalar_select %p74, %s75, %s76
      %p80 = pneg %p74
      %p81 = scmp.eq.s32.totalorder %s12, 1
      %p82 = por %p80, %p81
      %p83 = scmp.ne.s32.totalorder %s75, %s78
      %p84 = scmp.eq.s32.totalorder %s12, 0
      %p85 = por %p83, %p84
      %p86 = scmp.ne.s32.totalorder %s75, %s78
      %p87 = scmp.eq.s32.totalorder %s17, 1
      %p88 = por %p86, %p87
      %p89 = scmp.ne.s32.totalorder %s78, %s79
      %p90 = scmp.eq.s32.totalorder %s17, 0
      %p91 = por %p89, %p90
      %p92 = scmp.ne.s32.totalorder %s78, %s79
      %p93 = scmp.eq.s32.totalorder %s18, 1
      %p94 = por %p92, %p93
      %p96 = scmp.ne.s32.totalorder %s79, %s95
      %p97 = scmp.eq.s32.totalorder %s18, 0
      %p98 = por %p96, %p97
      %s99 = sadd.s32 %s20, %s21
      %s100 = sadd.s32 %s34, %s30
      %s101 = ssub.s32 %s19, %s38
      %s102 = ssub.s32 %s99, %s100
      %s103 = sor.u32 %s101, %s102
      %p104 = scmp.eq.s32.totalorder %s103, 0
      %s106 = sadd.s32 %s105, 1
      %s107 = scalar_select %p104, %s105, %s106
      %p110 = pneg %p104
      %p111 = scmp.eq.s32.totalorder %s12, 1
      %p112 = por %p110, %p111
      %p113 = scmp.ne.s32.totalorder %s105, %s108
      %p114 = scmp.eq.s32.totalorder %s12, 0
      %p115 = por %p113, %p114
      %p116 = scmp.ne.s32.totalorder %s105, %s108
      %p117 = scmp.eq.s32.totalorder %s17, 1
      %p118 = por %p116, %p117
      %p119 = scmp.ne.s32.totalorder %s108, %s109
      %p120 = scmp.eq.s32.totalorder %s17, 0
      %p121 = por %p119, %p120
      %p122 = scmp.ne.s32.totalorder %s108, %s109
      %p123 = scmp.eq.s32.totalorder %s18, 1
      %p124 = por %p122, %p123
      %p126 = scmp.ne.s32.totalorder %s109, %s125
      %p127 = scmp.eq.s32.totalorder %s18, 0
      %p128 = por %p126, %p127
      %s129 = sadd.s32 %s19, %s20
      %s130 = sadd.s32 %s38, %s34
      %s131 = ssub.s32 %s129, %s130
      %p132 = scmp.eq.s32.totalorder %s131, 0
      %s134 = sadd.s32 %s133, 1
      %s135 = scalar_select %p132, %s133, %s134
      %p138 = pneg %p132
      %p139 = scmp.eq.s32.totalorder %s12, 1
      %p140 = por %p138, %p139
      %p141 = scmp.ne.s32.totalorder %s133, %s136
      %p142 = scmp.eq.s32.totalorder %s12, 0
      %p143 = por %p141, %p142
      %p144 = scmp.ne.s32.totalorder %s133, %s136
      %p145 = scmp.eq.s32.totalorder %s17, 1
      %p146 = por %p144, %p145
      %p147 = scmp.ne.s32.totalorder %s136, %s137
      %p148 = scmp.eq.s32.totalorder %s17, 0
      %p149 = por %p147, %p148
      %p150 = scmp.ne.s32.totalorder %s136, %s137
      %p151 = scmp.eq.s32.totalorder %s18, 1
      %p152 = por %p150, %p151
      %p154 = scmp.ne.s32.totalorder %s137, %s153
      %p155 = scmp.eq.s32.totalorder %s18, 0
      %p156 = por %p154, %p155
      %p157 = scmp.le.s32.totalorder 1, %s12
      %p158 = scmp.lt.s32.totalorder %s12, 3
      %p159 = pnand %p157, %p158
      %p160 = pneg %p159
      // Predicated region
      $region9: #{tpu_custom_call.1} parent=5 // pred_check
        _
      $region10: #{tpu_custom_call.1} parent=5 // pred_check_branch
        %162 = sbr.rel (%p159) target = $region12
      $region11: #{tpu_custom_call.1} parent=5 // pred_region
        %s163 = ssub.s32 %s12, 1
      $region12: #{tpu_custom_call.1} parent=5 // pred_fallthru
        _
      %p164 = scmp.lt.s32.totalorder %s12, 2
      // Predicated region
      $region13: #{tpu_custom_call.1} parent=5 // pred_check
        %p165 = pneg %p164
      $region14: #{tpu_custom_call.1} parent=5 // pred_check_branch
        %167 = sbr.rel (%p165) target = $region16
      $region15: #{tpu_custom_call.1} parent=5 // pred_region
        // Predicated region
        $region17: #{tpu_custom_call.1} parent=15 // pred_check
          %p168 = pneg %p55
        $region18: #{tpu_custom_call.1} parent=15 // pred_check_branch
          %170 = sbr.rel (%p168) target = $region20
        $region19: #{tpu_custom_call.1} parent=15 // pred_region
          %s171 = sadd.s32 %s20, %s21
          %s172 = smul.u32 2, %s171
          %p173 = scmp.lt.s32.totalorder %s19, 1
          %s174 = scalar_select %p173, %s19, 1
          %p175 = scmp.lt.s32.totalorder %s172, 1
          %s176 = scalar_select %p175, %s172, 1
          %s177 = smul.addr %s174, 2
          %s178 = sadd.s32 %s176, %s177
          %s179 = smul.addr %s178, 8
          %s180 = scalar_lea.vmem %s0, %s179
          %s181 = sadd.s32 %s20, %s21
          %s182 = smul.u32 2, %s181
        $region20: #{tpu_custom_call.1} parent=15 // pred_fallthru
          _
        // Predicated region
        $region21: #{tpu_custom_call.1} parent=15 // pred_check
          %p183 = pneg %p85
        $region22: #{tpu_custom_call.1} parent=15 // pred_check_branch
          %185 = sbr.rel (%p183) target = $region24
        $region23: #{tpu_custom_call.1} parent=15 // pred_region
          %s186 = sadd.s32 %s20, %s21
          %s187 = smul.u32 2, %s186
          %p188 = scmp.lt.s32.totalorder %s19, 1
          %s189 = scalar_select %p188, %s19, 1
          %p190 = scmp.lt.s32.totalorder %s187, 1
          %s191 = scalar_select %p190, %s187, 1
          %s192 = smul.addr %s189, 2
          %s193 = sadd.s32 %s191, %s192
          %s194 = scalar_lea.vmem %s1, %s193
          %s195 = sadd.s32 %s20, %s21
          %s196 = smul.u32 2, %s195
        $region24: #{tpu_custom_call.1} parent=15 // pred_fallthru
          _
        // Predicated region
        $region25: #{tpu_custom_call.1} parent=15 // pred_check
          %p197 = pneg %p115
        $region26: #{tpu_custom_call.1} parent=15 // pred_check_branch
          %199 = sbr.rel (%p197) target = $region28
        $region27: #{tpu_custom_call.1} parent=15 // pred_region
          %s200 = sadd.s32 %s20, %s21
          %s201 = smul.u32 2, %s200
          %p202 = scmp.lt.s32.totalorder %s19, 1
          %s203 = scalar_select %p202, %s19, 1
          %p204 = scmp.lt.s32.totalorder %s201, 1
          %s205 = scalar_select %p204, %s201, 1
          %s206 = smul.addr %s203, 2
          %s207 = sadd.s32 %s205, %s206
          %s208 = scalar_lea.vmem %s2, %s207
          %s209 = sadd.s32 %s20, %s21
          %s210 = smul.u32 2, %s209
        $region28: #{tpu_custom_call.1} parent=15 // pred_fallthru
          _
      $region16: #{tpu_custom_call.1} parent=5 // pred_fallthru
        _
      %p211 = scmp.le.s32.totalorder 1, %s12
      %p212 = scmp.lt.s32.totalorder %s12, 3
      %p213 = pnand %p211, %p212
      %p214 = pneg %p213
      // Predicated region
      $region29: #{tpu_custom_call.1} parent=5 // pred_check
        _
      $region30: #{tpu_custom_call.1} parent=5 // pred_check_branch
        %216 = sbr.rel (%p213) target = $region32
      $region31: #{tpu_custom_call.1} parent=5 // pred_region
        %s217 = ssub.s32 %s12, 1
        %s218 = sadd.s32 %s23, %s24
        %s219 = smul.u32 2, %s218
        %p220 = scmp.lt.s32.totalorder %s22, 1
        %s221 = scalar_select %p220, %s22, 1
        %p222 = scmp.lt.s32.totalorder %s219, 1
        %s223 = scalar_select %p222, %s219, 1
        %s224 = smul.addr %s221, 2
        %s225 = sadd.s32 %s223, %s224
        %s226 = smul.addr %s225, 8
        %s227 = scalar_lea.vmem %s0, %s226
        %p228 = pneg %p61
        %p229 = pneg %p58
        %s230 = sadd.s32 %s23, %s24
        %s231 = smul.u32 2, %s230
        %p232 = scmp.lt.s32.totalorder %s22, 1
        %s233 = scalar_select %p232, %s22, 1
        %p234 = scmp.lt.s32.totalorder %s231, 1
        %s235 = scalar_select %p234, %s231, 1
        %s236 = smul.addr %s233, 2
        %s237 = sadd.s32 %s235, %s236
        %s238 = scalar_lea.vmem %s1, %s237
        %p239 = pneg %p91
        %p240 = pneg %p88
        %s241 = sadd.s32 %s23, %s24
        %s242 = smul.u32 2, %s241
        %p243 = scmp.lt.s32.totalorder %s22, 1
        %s244 = scalar_select %p243, %s22, 1
        %p245 = scmp.lt.s32.totalorder %s242, 1
        %s246 = scalar_select %p245, %s242, 1
        %s247 = smul.addr %s244, 2
        %s248 = sadd.s32 %s246, %s247
        %s249 = scalar_lea.vmem %s2, %s248
        %p250 = pneg %p121
        %p251 = pneg %p118
        %p252 = pneg %p149
        %p253 = pneg %p146
        %s254 = sand.u32 %s136, 1
        %s255 = scalar_lea.sflag [#allocation4], %s254
        %s256 = sand.u32 %s136, 1
        %s257 = smul.addr %s256, 8
        %s258 = scalar_lea.vmem [#allocation3], %s257
        %s259 = sadd.s32 %s23, %s24
        %s260 = smul.u32 2, %s259
        %p261 = scmp.lt.s32.totalorder %s22, 1
        %s262 = scalar_select %p261, %s22, 1
        %p263 = scmp.lt.s32.totalorder %s260, 1
        %s264 = scalar_select %p263, %s260, 1
        %s265 = smul.addr %s262, 2
        %s266 = sadd.s32 %s264, %s265
        %s267 = smul.addr %s266, 8
        %s268 = scalar_lea.vmem %s0, %s267
        %s269 = sadd.s32 %s23, %s24
        %s270 = smul.u32 2, %s269
        %s271 = sadd.s32 %s23, %s24
        %s272 = smul.u32 2, %s271
        %p273 = scmp.lt.s32.totalorder %s22, 1
        %s274 = scalar_select %p273, %s22, 1
        %p275 = scmp.lt.s32.totalorder %s272, 1
        %s276 = scalar_select %p275, %s272, 1
        %s277 = smul.addr %s274, 2
        %s278 = sadd.s32 %s276, %s277
        %s279 = scalar_lea.vmem %s1, %s278
        %s280 = sadd.s32 %s23, %s24
        %s281 = smul.u32 2, %s280
        %s282 = sadd.s32 %s23, %s24
        %s283 = smul.u32 2, %s282
        %p284 = scmp.lt.s32.totalorder %s22, 1
        %s285 = scalar_select %p284, %s22, 1
        %p286 = scmp.lt.s32.totalorder %s283, 1
        %s287 = scalar_select %p286, %s283, 1
        %s288 = smul.addr %s285, 2
        %s289 = sadd.s32 %s287, %s288
        %s290 = scalar_lea.vmem %s2, %s289
        %s291 = sadd.s32 %s23, %s24
        %s292 = smul.u32 2, %s291
        %s293 = sadd.s32 %s22, %s23
        %p294 = scmp.eq.s32.totalorder %s24, 0
        // Predicated region
        $region33: #{tpu_custom_call.1} parent=31 // pred_check
          %p295 = pneg %p294
        $region34: #{tpu_custom_call.1} parent=31 // pred_check_branch
          %297 = sbr.rel (%p295) target = $region36
        $region35: #{tpu_custom_call.1} parent=31 // pred_region
          %v298 = vlaneseq
          %vm299 = vcmp.ge.s32.totalorder %v298, 0
          %vm300 = vcmp.lt.s32.totalorder %v298, 256
          %vm301 = vmand %vm299, %vm300
          %302 = vst.msk [vmem:[#allocation2] sm:$0x3] %vm301, 0.0
        $region36: #{tpu_custom_call.1} parent=31 // pred_fallthru
          _
        %v303 = vlaneseq
        %v304 = vshrl.u32 %v303, 7
        %v305 = vld [vmem:[#allocation2] sm:$0x3]
        %v306 = vld [vmem:[%s268] sm:$0x1f]
        %v307 = vld [vmem:[%s268 + $0x8] sm:$0x1f]
        %v308 = vld [vmem:[%s279] sm:$0x3]
        %v309 = vld [vmem:[%s290] sm:$0x3]
        %vm310 = vcmask 1044480
        %v311 = vsel %vm310, %v306, -inf
        %v312 = vrot.slane %v311, 4
        %v313 = vmax.f32 %v311, %v312
        %v314 = vrot.slane %v313, 2
        %v315 = vmax.f32 %v313, %v314
        %v316 = vrot.slane %v315, 1
        %v317 = vmax.f32 %v315, %v316
        %v318 = vsel %vm310, %v307, -inf
        %v319 = vrot.slane %v318, 4
        %v320 = vmax.f32 %v318, %v319
        %v321 = vrot.slane %v320, 2
        %v322 = vmax.f32 %v320, %v321
        %v323 = vrot.slane %v322, 1
        %v324 = vmax.f32 %v322, %v323
        %v325 = vsub.f32 %v306, %v317
        %v326 = vsub.f32 %v307, %v324
        %v327 = vmul.f32 %v325, 1.442695
        %v328 = vpow.pop %v327
        %v329 = vmul.f32 %v326, 1.442695
        %v330 = vpow.pop %v329
        %v331 = vsel %vm310, %v328, 0.0
        %v332 = vrot.slane %v331, 4
        %v333 = vadd.f32 %v331, %v332
        %v334 = vrot.slane %v333, 2
        %v335 = vadd.f32 %v333, %v334
        %v336 = vrot.slane %v335, 1
        %v337 = vadd.f32 %v335, %v336
        %v338 = vsel %vm310, %v330, 0.0
        %v339 = vrot.slane %v338, 4
        %v340 = vadd.f32 %v338, %v339
        %v341 = vrot.slane %v340, 2
        %v342 = vadd.f32 %v340, %v341
        %v343 = vrot.slane %v342, 1
        %v344 = vadd.f32 %v342, %v343
        %v345 = vlaneseq
        %v346 = vshrl.u32 %v345, 7
        %v347 = vsub.s32 0, %v346
        %v348 = vrot.slane %v308, %v347
        %v349 = vlaneseq
        %v350 = vshrl.u32 %v349, 7
        %v351 = vsub.s32 1, %v350
        %v352 = vrot.slane %v308, %v351
        %vm353 = vcmp.eq.s32.totalorder %v304, %v348
        %vm354 = vcmp.eq.s32.totalorder %v304, %v352
        %v355 = vsel %vm353, %v325, 0.0
        %v356 = vsel %vm354, %v326, 0.0
        %v357 = vsel %vm310, %v355, 0.0
        %v358 = vrot.slane %v357, 4
        %v359 = vadd.f32 %v357, %v358
        %v360 = vrot.slane %v359, 2
        %v361 = vadd.f32 %v359, %v360
        %v362 = vrot.slane %v361, 1
        %v363 = vadd.f32 %v361, %v362
        %v364 = vsel %vm310, %v356, 0.0
        %v365 = vrot.slane %v364, 4
        %v366 = vadd.f32 %v364, %v365
        %v367 = vrot.slane %v366, 2
        %v368 = vadd.f32 %v366, %v367
        %v369 = vrot.slane %v368, 1
        %v370 = vadd.f32 %v368, %v369
        %v371 = vlog2.pop %v337
        %v372 = vmul.f32 %v371, 0.6931472
        %v373 = vlog2.pop %v344
        %v374 = vmul.f32 %v373, 0.6931472
        %v375 = vsub.f32 %v372, %v363
        %v376 = vsub.f32 %v374, %v370
        %vm377 = vcmp.gt.f32.partialorder %v309, 0.0
        %v380 = vcombine.low %v375, %v376
        %v382 = vunpack.c.l.s4 1966171168
        %v383 = vunpack.c.0.s8 %v382
        %v384 = vlaneseq
        %v385 = vshrl.u32 %v384, 7
        %v386 = vsub.s32 %v383, %v385
        %v387 = vrot.slane %v380, %v386
        %v389 = vunpack.c.l.s4 1966171168
        %v390 = vunpack.c.0.s8 %v389
        %v391 = vlaneseq
        %v392 = vshrl.u32 %v391, 7
        %v393 = vsub.s32 %v390, %v392
        %v394 = vrot.slane %v387, %v393
        %v396 = vmul.f32 %v309, %v394
        %v397 = vsel %vm377, %v396, 0.0
        %v398 = vadd.f32 %v305, %v397
        %v399 = vlaneseq
        %vm400 = vcmp.ge.s32.totalorder %v399, 0
        %vm401 = vcmp.lt.s32.totalorder %v399, 256
        %vm402 = vmand %vm400, %vm401
        %403 = vst.msk [vmem:[#allocation2] sm:$0x3] %vm402, %v398
        // Predicated region
        $region37: #{tpu_custom_call.1} parent=31 // pred_check
          %p404 = pneg %p294
        $region38: #{tpu_custom_call.1} parent=31 // pred_check_branch
          %406 = sbr.rel (%p404) target = $region40
        $region39: #{tpu_custom_call.1} parent=31 // pred_region
          %v408 = vlaneseq
          %v409 = vshrl.u32 %v408, 7
          %v410 = vsub.s32 0, %v409
          %v411 = vrot.slane %v398, %v410
          %v412 = vlaneseq
          %v413 = vshrl.u32 %v412, 7
          %v414 = vsub.s32 1, %v413
          %v415 = vrot.slane %v398, %v414
          %vm418 = vcmask 1040384
          %v419 = vsel %vm418, %v411, 0.0
          %v420 = vsel %vm418, %v415, 0.0
          %v421 = vadd.f32 %v419, %v420
          %422 = vadd.xlane.f32.xlu0 %v421
          %v423 = vpop.xlane.xlu0 %422
          %v424 = vlaneseq
          %v425 = vshrl.u32 %v424, 7
          %v426 = vsub.s32 0, %v425
          %v427 = vrot.slane %v423, %v426
          %428 = vst [vmem:[%s258] sm:$0xff] %v427
        $region40: #{tpu_custom_call.1} parent=31 // pred_fallthru
          _
        %s429 = sand.u32 %s136, 1
        %s430 = scalar_lea.sflag [#allocation4], %s429
        %s431 = sand.u32 %s136, 1
        %s432 = smul.addr %s431, 8
        %s433 = scalar_lea.vmem [#allocation3], %s432
        // Predicated region
        $region41: #{tpu_custom_call.1} parent=31 // pred_check
          %p434 = pneg %p146
        $region42: #{tpu_custom_call.1} parent=31 // pred_check_branch
          %436 = sbr.rel (%p434) target = $region44
        $region43: #{tpu_custom_call.1} parent=31 // pred_region
          %s437 = sadd.s32 %s22, %s23
          %s439 = ssub.s32 128, 128
          %440 = vsyncadd %s430, %s439
          %s441 = smul.addr %s437, 128
          %s442 = scalar_lea.hbm %s3, %s441
          %s444 = sshll.u32 %s433, 4
          %s445 = int_to_ptr.vmem [resolvable:$true] %s444
          %447 = dma.vmem_to_hbm [thread:$0]  %s445, 128, %s442, %s430
        $region44: #{tpu_custom_call.1} parent=31 // pred_fallthru
          _
      $region32: #{tpu_custom_call.1} parent=5 // pred_fallthru
        _
      %p448 = scmp.le.s32.totalorder 2, %s12
      // Predicated region
      $region45: #{tpu_custom_call.1} parent=5 // pred_check
        %p449 = pneg %p448
      $region46: #{tpu_custom_call.1} parent=5 // pred_check_branch
        %451 = sbr.rel (%p449) target = $region48
      $region47: #{tpu_custom_call.1} parent=5 // pred_region
        %s452 = ssub.s32 %s12, 2
        // Predicated region
        $region49: #{tpu_custom_call.1} parent=47 // pred_check
          %p453 = pneg %p152
        $region50: #{tpu_custom_call.1} parent=47 // pred_check_branch
          %455 = sbr.rel (%p453) target = $region52
        $region51: #{tpu_custom_call.1} parent=47 // pred_region
          %s456 = sand.u32 %s137, 1
          %s457 = scalar_lea.sflag [#allocation4], %s456
          %s458 = sand.u32 %s137, 1
          %s459 = smul.addr %s458, 8
          %s460 = scalar_lea.vmem [#allocation3], %s459
          %461 = dma.done %s457, 128
        $region52: #{tpu_custom_call.1} parent=47 // pred_fallthru
          _
      $region48: #{tpu_custom_call.1} parent=5 // pred_fallthru
        _
    $region6: #{tpu_custom_call.1} parent=1 // loop_footer
      %s16 = sadd.s32 1, %s12
    $region7: #{tpu_custom_call.1} parent=1 // loop_footer_branch
      %11 = sbr.rel target = $region3
    $region8: #{tpu_custom_call.1} parent=1 // loop_exit
      _
    %462 = vsyncpa [#allocation4], 1
    %s463 = scalar_lea.sflag [#allocation4], 1
    %464 = vsyncpa %s463, 1

</llo_original>
